<compile_context>
chip_gen: v6e
topology: v6e:2x2x1
jax: 0.10.0
libtpu: 0.0.40
codegen_flags: <defaults>
</compile_context>

<pallas_src>
import functools

import jax
import jax.numpy as jnp
import numpy as np
from jax.experimental import pallas as pl
from jax.experimental.pallas import tpu as pltpu

_LANE = 128
_SUBLANE = 16        # bf16 packs 16 rows per sublane-vreg -> tm multiple of 16
_K_ALIGN = 32        # im2col contraction dim (3*3*3 = 27) padded only to 32
_TM_MAX = 1024       # large row tiles; VMEM footprint stays tiny (<1 MiB tile)


def _round_up(x, m):
    return (x + m - 1) // m * m


# ----------------------------------------------------------------------------
# Pallas kernels (fully fused: conv+ReLU -> GAP -> linear head -> L2 norm)
# ----------------------------------------------------------------------------
def _conv_gap_step(p_ref, wc_ref, bc_ref, acc_ref):
    """One row-tile of the conv matmul; accumulate the spatial sum per batch."""
    @pl.when(pl.program_id(1) == 0)
    def _():
        acc_ref[...] = jnp.zeros_like(acc_ref)

    # (tm, Kp) @ (Kp, Cp) bf16 on the MXU with f32 accumulation; bias + ReLU
    # on the VPU.  No per-tile row mask: padded rows are corrected at finalize.
    tile = jnp.dot(p_ref[0], wc_ref[...], preferred_element_type=jnp.float32)
    tile = jnp.maximum(tile + bc_ref[...], 0.0)
    acc_ref[...] += jnp.sum(tile, axis=0, keepdims=True)


def _gap_feature(acc_ref, bc_ref, *, ohw, n_pad):
    """Finalize GAP: remove padded-row contribution (ReLU(bias) each) and mean."""
    acc = acc_ref[...]
    if n_pad:
        acc = acc - float(n_pad) * jnp.maximum(bc_ref[...], 0.0)
    return acc * (1.0 / ohw)


def _l2_normalize(e):
    # F.normalize(p=2, dim=1, eps=1e-12); rsqrt goes to the EUP slot.
    ss = jnp.sum(e * e, axis=1, keepdims=True)
    return e * jax.lax.rsqrt(jnp.maximum(ss, 1e-24))


def _fused_noproj_kernel(p_ref, wc_ref, bc_ref, w1_ref, b1_ref,
                         o_ref, acc_ref, *, ohw, n_pad):
    _conv_gap_step(p_ref, wc_ref, bc_ref, acc_ref)

    @pl.when(pl.program_id(1) == pl.num_programs(1) - 1)
    def _():
        feat = _gap_feature(acc_ref, bc_ref, ohw=ohw, n_pad=n_pad)
        e = jnp.dot(feat, w1_ref[...], preferred_element_type=jnp.float32) + b1_ref[...]
        o_ref[0] = _l2_normalize(e)


def _fused_proj_kernel(p_ref, wc_ref, bc_ref, w1_ref, b1_ref, w2_ref, b2_ref,
                       o_ref, acc_ref, *, ohw, n_pad):
    _conv_gap_step(p_ref, wc_ref, bc_ref, acc_ref)

    @pl.when(pl.program_id(1) == pl.num_programs(1) - 1)
    def _():
        feat = _gap_feature(acc_ref, bc_ref, ohw=ohw, n_pad=n_pad)
        e = jnp.dot(feat, w1_ref[...], preferred_element_type=jnp.float32) + b1_ref[...]
        e = jnp.dot(e, w2_ref[...], preferred_element_type=jnp.float32) + b2_ref[...]
        o_ref[0] = _l2_normalize(e)


# ----------------------------------------------------------------------------
# Parameters (deterministic, synthetic) + one-time packing for the kernel
# ----------------------------------------------------------------------------
def init_params(key, embedding_dim=128, cin=3, stem_cout=32, feat_dim=512):
    k1, k2, k3, k4, k5, k6 = jax.random.split(key, 6)
    params = {
        # stem BasicConv2d(3, 32, k=3, s=2), BN folded into conv bias (HWIO)
        "conv_w": jax.random.normal(k1, (3, 3, cin, stem_cout), jnp.float32) * 0.1,
        "conv_b": jax.random.normal(k2, (stem_cout,), jnp.float32) * 0.01,
        # last_linear -> 512 (PyTorch Linear weight layout: (out, in))
        "last_w": jax.random.normal(k3, (feat_dim, stem_cout), jnp.float32) * 0.05,
        "last_b": jax.random.normal(k4, (feat_dim,), jnp.float32) * 0.01,
    }
    if embedding_dim != 512:
        params["proj_w"] = jax.random.normal(k5, (embedding_dim, feat_dim), jnp.float32) * 0.05
        params["proj_b"] = jax.random.normal(k6, (embedding_dim,), jnp.float32) * 0.01
    else:
        params["proj_w"] = None
        params["proj_b"] = None
    return params


def pack_params(params, kh=3, kw=3):
    """Pre-transpose / pad / cast weights ONCE (not per forward).

    Matmul operands are bf16 (halves streamed bytes, MXU-native on v5e/v6e/v7x);
    biases stay f32 so bias/ReLU/GAP/L2-norm run in f32.
    """
    cin = params["conv_w"].shape[2]
    cout = params["conv_w"].shape[3]
    k = kh * kw * cin
    kp = _round_up(k, _K_ALIGN)                 # 27 -> 32 (NOT 128)
    cout_p = _round_up(cout, _LANE)             # 32 -> 128 (lane-dense output)

    wc = params["conv_w"].reshape(k, cout)      # (i,j,cin) fastest=cin
    wc = jnp.pad(wc, ((0, kp - k), (0, cout_p - cout))).astype(jnp.bfloat16)
    bc = jnp.pad(params["conv_b"], (0, cout_p - cout)).reshape(1, cout_p).astype(jnp.float32)

    w1 = jnp.pad(params["last_w"].T, ((0, cout_p - cout), (0, 0))).astype(jnp.bfloat16)
    b1 = params["last_b"].reshape(1, -1).astype(jnp.float32)

    packed = {"conv_w": wc, "conv_b": bc, "last_w": w1, "last_b": b1}
    if params["proj_w"] is not None:
        packed["proj_w"] = params["proj_w"].T.astype(jnp.bfloat16)   # (512, E)
        packed["proj_b"] = params["proj_b"].reshape(1, -1).astype(jnp.float32)
    else:
        packed["proj_w"] = None
        packed["proj_b"] = None
    return packed


# ----------------------------------------------------------------------------
# Forward pass (layout glue in JAX, all compute in one Pallas kernel)
# ----------------------------------------------------------------------------
def inception_resnet_backbone_forward(x_nchw, packed):
    # NCHW -> NHWC and cast to bf16 once, so the im2col intermediate and the
    # streamed patch tiles are all half-width.
    x = jnp.transpose(x_nchw, (0, 2, 3, 1)).astype(jnp.bfloat16)
    B, H, W, C = x.shape
    kh = kw = 3
    stride = 2
    oh = (H - kh) // stride + 1
    ow = (W - kw) // stride + 1
    ohw = oh * ow

    # im2col patch extraction (pure layout glue; see TODO at top of file)
    cols = []
    for i in range(kh):
        for j in range(kw):
            cols.append(x[:, i:i + stride * oh:stride, j:j + stride * ow:stride, :])
    patches = jnp.stack(cols, axis=3).reshape(B, ohw, kh * kw * C)   # Cin fastest

    # Row tiling (multiple of 16 sublanes for bf16) + minimal zero padding.
    if ohw <= _TM_MAX:
        tm = _round_up(ohw, _SUBLANE)
        ohw_pad = tm
    else:
        tm = _TM_MAX
        ohw_pad = _round_up(ohw, tm)
    n_rt = ohw_pad // tm
    n_pad_rows = ohw_pad - ohw

    kp = packed["conv_w"].shape[0]        # contraction dim, padded to 32 only
    cout_p = packed["conv_w"].shape[1]    # conv channels, padded to 128
    feat_dim = packed["last_w"].shape[1]  # 512

    patches = jnp.pad(patches, ((0, 0), (0, n_pad_rows), (0, kp - kh * kw * C)))

    in_specs = [
        # Patch row tile: last dim == full array dim (32), so the (8,128)
        # lane rule is satisfied without padding K to 128.
        pl.BlockSpec((1, tm, kp), lambda b, r: (b, r, 0)),
        pl.BlockSpec((kp, cout_p), lambda b, r: (0, 0)),         # conv weight (resident)
        pl.BlockSpec((1, cout_p), lambda b, r: (0, 0)),          # conv bias
        pl.BlockSpec((cout_p, feat_dim), lambda b, r: (0, 0)),   # last_linear W (in,out)
        pl.BlockSpec((1, feat_dim), lambda b, r: (0, 0)),        # last_linear b
    ]
    args = [patches, packed["conv_w"], packed["conv_b"],
            packed["last_w"], packed["last_b"]]

    if packed["proj_w"] is not None:
        emb = packed["proj_w"].shape[1]
        in_specs += [pl.BlockSpec((feat_dim, emb), lambda b, r: (0, 0)),
                     pl.BlockSpec((1, emb), lambda b, r: (0, 0))]
        args += [packed["proj_w"], packed["proj_b"]]
        kernel = functools.partial(_fused_proj_kernel, ohw=ohw, n_pad=n_pad_rows)
    else:
        emb = feat_dim
        kernel = functools.partial(_fused_noproj_kernel, ohw=ohw, n_pad=n_pad_rows)

    # NOTE(v7x megacore): batch is the only "parallel" axis; keep B >= 2 (and
    # preferably even) so both TensorCores get work.
    out = pl.pallas_call(
        kernel,
        out_shape=jax.ShapeDtypeStruct((B, 1, emb), jnp.float32),
        grid=(B, n_rt),
        in_specs=in_specs,
        out_specs=pl.BlockSpec((1, 1, emb), lambda b, r: (b, 0, 0)),
        scratch_shapes=[pltpu.VMEM((1, cout_p), jnp.float32)],   # per-batch GAP accumulator
        compiler_params=pltpu.CompilerParams(
            dimension_semantics=("parallel", "arbitrary")),
    )(*args)
    return out.reshape(B, emb)


# ----------------------------------------------------------------------------
# Pure-JAX reference for verification (f32 weights, full precision)
# ----------------------------------------------------------------------------
def reference_forward(x_nchw, params):
    x = jnp.transpose(x_nchw, (0, 2, 3, 1))
    conv = jax.lax.conv_general_dilated(
        x, params["conv_w"], window_strides=(2, 2), padding="VALID",
        dimension_numbers=("NHWC", "HWIO", "NHWC"))
    conv = jnp.maximum(conv + params["conv_b"], 0.0)
    feat = jnp.mean(conv, axis=(1, 2))
    e = feat @ params["last_w"].T + params["last_b"]
    if params["proj_w"] is not None:
        e = e @ params["proj_w"].T + params["proj_b"]
    n = jnp.sqrt(jnp.sum(e * e, axis=1, keepdims=True))
    return e / jnp.maximum(n, 1e-12)


# ----------------------------------------------------------------------------
if __name__ == "__main__":
    key = jax.random.PRNGKey(0)
    kx, kparam = jax.random.split(key)

    B, C, H, W = 2, 3, 16, 16
    embedding_dim = 128  # != 512 -> exercises the proj Linear path
    x = jax.random.normal(kx, (B, C, H, W), jnp.float32)
    params = init_params(kparam, embedding_dim=embedding_dim)
    packed = pack_params(params)   # pre-transpose / pad / cast once, outside the forward

    fwd = jax.jit(inception_resnet_backbone_forward)
    out = jax.block_until_ready(fwd(x, packed))

    ref = jax.block_until_ready(reference_forward(x, params))
    assert out.shape == (B, embedding_dim), out.shape
    # bf16 streaming of patches/weights -> ~1e-2-level agreement vs f32 reference
    np.testing.assert_allclose(np.asarray(out), np.asarray(ref), rtol=2e-2, atol=2e-2)
    # embeddings are L2-normalized along dim=1 (computed in f32 -> tight)
    np.testing.assert_allclose(np.linalg.norm(np.asarray(out), axis=1),
                               np.ones(B), rtol=1e-5, atol=1e-5)

    print("KERNEL_OK")
</pallas_src>

<mosaic_0001>
module attributes {stable_mosaic.version = 11 : i64} {
  func.func @_fused_proj_kernel(%arg0: i32, %arg1: i32, %arg2: memref<1x64x32xbf16, #tpu.memory_space<vmem>>, %arg3: memref<32x128xbf16, #tpu.memory_space<vmem>>, %arg4: memref<1x128xf32, #tpu.memory_space<vmem>>, %arg5: memref<128x512xbf16, #tpu.memory_space<vmem>>, %arg6: memref<1x512xf32, #tpu.memory_space<vmem>>, %arg7: memref<512x128xbf16, #tpu.memory_space<vmem>>, %arg8: memref<1x128xf32, #tpu.memory_space<vmem>>, %arg9: memref<1x1x128xf32, #tpu.memory_space<vmem>>, %arg10: memref<1x128xf32, #tpu.memory_space<vmem>>) attributes {dimension_semantics = [#tpu.dimension_semantics<parallel>, #tpu.dimension_semantics<arbitrary>], iteration_bounds = array<i64: 2, 1>, scalar_prefetch = 0 : i64, scratch_operands = 1 : i64, tpu.core_type = #tpu.core_type<tc>, window_params = [{transform_indices = @transform_0, window_bounds = array<i64: 1, 64, 32>}, {pipeline_mode = #tpu.pipeline_mode<synchronous>, transform_indices = @transform_1, window_bounds = array<i64: 32, 128>}, {pipeline_mode = #tpu.pipeline_mode<synchronous>, transform_indices = @transform_2, window_bounds = array<i64: 1, 128>}, {pipeline_mode = #tpu.pipeline_mode<synchronous>, transform_indices = @transform_3, window_bounds = array<i64: 128, 512>}, {pipeline_mode = #tpu.pipeline_mode<synchronous>, transform_indices = @transform_4, window_bounds = array<i64: 1, 512>}, {pipeline_mode = #tpu.pipeline_mode<synchronous>, transform_indices = @transform_5, window_bounds = array<i64: 512, 128>}, {pipeline_mode = #tpu.pipeline_mode<synchronous>, transform_indices = @transform_6, window_bounds = array<i64: 1, 128>}, {transform_indices = @transform_7, window_bounds = array<i64: 1, 1, 128>}]} {
    %c0_i32 = arith.constant 0 : i32
    %0 = arith.cmpi eq, %arg1, %c0_i32 : i32
    %1 = arith.extui %0 : i1 to i32
    %c0_i32_0 = arith.constant 0 : i32
    %2 = arith.cmpi ne, %1, %c0_i32_0 : i32
    scf.if %2 {
      %cst_15 = arith.constant 0.000000e+00 : f32
      %20 = vector.broadcast %cst_15 : f32 to vector<1x128xf32>
      %c0_16 = arith.constant 0 : index
      %c0_17 = arith.constant 0 : index
      %21 = vector.load %arg10[%c0_16, %c0_17] : memref<1x128xf32, #tpu.memory_space<vmem>>, vector<1x128xf32>
      tpu.vector_store %arg10[%c0_16, %c0_17], %20 {strides = array<i32>} : memref<1x128xf32, #tpu.memory_space<vmem>>, vector<1x128xf32>,
    } else {
    }
    %c0 = arith.constant 0 : index
    %c0_1 = arith.constant 0 : index
    %c0_2 = arith.constant 0 : index
    %3 = vector.load %arg2[%c0, %c0_1, %c0_2] : memref<1x64x32xbf16, #tpu.memory_space<vmem>>, vector<1x64x32xbf16>
    %4 = vector.shape_cast %3 : vector<1x64x32xbf16> to vector<64x32xbf16>
    %c0_3 = arith.constant 0 : index
    %c0_4 = arith.constant 0 : index
    %5 = vector.load %arg3[%c0_3, %c0_4] : memref<32x128xbf16, #tpu.memory_space<vmem>>, vector<32x128xbf16>
    %cst = arith.constant dense<0.000000e+00> : vector<64x128xf32>
    %6 = tpu.matmul %4, %5, %cst {dimension_numbers = #tpu.dot_dimension_numbers<[1], [0], [0], [1], [0, 0, 1, 1], [], []>} : vector<64x32xbf16>, vector<32x128xbf16>, vector<64x128xf32> -> vector<64x128xf32>
    %c0_5 = arith.constant 0 : index
    %c0_6 = arith.constant 0 : index
    %7 = vector.load %arg4[%c0_5, %c0_6] : memref<1x128xf32, #tpu.memory_space<vmem>>, vector<1x128xf32>
    %8 = vector.broadcast %7 : vector<1x128xf32> to vector<64x128xf32>
    %9 = arith.addf %6, %8 : vector<64x128xf32>
    %cst_7 = arith.constant 0.000000e+00 : f32
    %10 = vector.broadcast %cst_7 : f32 to vector<64x128xf32>
    %11 = arith.maximumf %9, %10 : vector<64x128xf32>
    %c0_8 = arith.constant 0 : index
    %c0_9 = arith.constant 0 : index
    %12 = vector.load %arg10[%c0_8, %c0_9] : memref<1x128xf32, #tpu.memory_space<vmem>>, vector<1x128xf32>
    %cst_10 = arith.constant dense<0.000000e+00> : vector<128xf32>
    %13 = vector.multi_reduction <add>, %11, %cst_10 [0] : vector<64x128xf32> to vector<128xf32>
    %14 = vector.shape_cast %13 : vector<128xf32> to vector<1x128xf32>
    %15 = arith.addf %12, %14 : vector<1x128xf32>
    %c0_11 = arith.constant 0 : index
    %c0_12 = arith.constant 0 : index
    %16 = vector.load %arg10[%c0_11, %c0_12] : memref<1x128xf32, #tpu.memory_space<vmem>>, vector<1x128xf32>
    tpu.vector_store %arg10[%c0_11, %c0_12], %15 {strides = array<i32>} : memref<1x128xf32, #tpu.memory_space<vmem>>, vector<1x128xf32>,
    %c0_i32_13 = arith.constant 0 : i32
    %17 = arith.cmpi eq, %arg1, %c0_i32_13 : i32
    %18 = arith.extui %17 : i1 to i32
    %c0_i32_14 = arith.constant 0 : i32
    %19 = arith.cmpi ne, %18, %c0_i32_14 : i32
    scf.if %19 {
      %c0_15 = arith.constant 0 : index
      %c0_16 = arith.constant 0 : index
      %20 = vector.load %arg10[%c0_15, %c0_16] : memref<1x128xf32, #tpu.memory_space<vmem>>, vector<1x128xf32>
      %c0_17 = arith.constant 0 : index
      %c0_18 = arith.constant 0 : index
      %21 = vector.load %arg4[%c0_17, %c0_18] : memref<1x128xf32, #tpu.memory_space<vmem>>, vector<1x128xf32>
      %cst_19 = arith.constant 0.000000e+00 : f32
      %22 = vector.broadcast %cst_19 : f32 to vector<1x128xf32>
      %23 = arith.maximumf %21, %22 : vector<1x128xf32>
      %cst_20 = arith.constant 1.500000e+01 : f32
      %24 = vector.broadcast %cst_20 : f32 to vector<1x128xf32>
      %25 = arith.mulf %24, %23 : vector<1x128xf32>
      %26 = arith.subf %20, %25 : vector<1x128xf32>
      %cst_21 = arith.constant 0.0204081628 : f32
      %27 = vector.broadcast %cst_21 : f32 to vector<1x128xf32>
      %28 = arith.mulf %26, %27 : vector<1x128xf32>
      %c0_22 = arith.constant 0 : index
      %c0_23 = arith.constant 0 : index
      %29 = vector.load %arg5[%c0_22, %c0_23] : memref<128x512xbf16, #tpu.memory_space<vmem>>, vector<128x512xbf16>
      %cst_24 = arith.constant dense<0.000000e+00> : vector<1x512xf32>
      %30 = tpu.matmul %28, %29, %cst_24 {dimension_numbers = #tpu.dot_dimension_numbers<[1], [0], [0], [1], [0, 0, 1, 1], [], []>} : vector<1x128xf32>, vector<128x512xbf16>, vector<1x512xf32> -> vector<1x512xf32>
      %c0_25 = arith.constant 0 : index
      %c0_26 = arith.constant 0 : index
      %31 = vector.load %arg6[%c0_25, %c0_26] : memref<1x512xf32, #tpu.memory_space<vmem>>, vector<1x512xf32>
      %32 = arith.addf %30, %31 : vector<1x512xf32>
      %c0_27 = arith.constant 0 : index
      %c0_28 = arith.constant 0 : index
      %33 = vector.load %arg7[%c0_27, %c0_28] : memref<512x128xbf16, #tpu.memory_space<vmem>>, vector<512x128xbf16>
      %cst_29 = arith.constant dense<0.000000e+00> : vector<1x128xf32>
      %34 = tpu.matmul %32, %33, %cst_29 {dimension_numbers = #tpu.dot_dimension_numbers<[1], [0], [0], [1], [0, 0, 1, 1], [], []>} : vector<1x512xf32>, vector<512x128xbf16>, vector<1x128xf32> -> vector<1x128xf32>
      %c0_30 = arith.constant 0 : index
      %c0_31 = arith.constant 0 : index
      %35 = vector.load %arg8[%c0_30, %c0_31] : memref<1x128xf32, #tpu.memory_space<vmem>>, vector<1x128xf32>
      %36 = arith.addf %34, %35 : vector<1x128xf32>
      %37 = arith.mulf %36, %36 : vector<1x128xf32>
      %cst_32 = arith.constant dense<0.000000e+00> : vector<1xf32>
      %38 = vector.multi_reduction <add>, %37, %cst_32 [1] : vector<1x128xf32> to vector<1xf32>
      %39 = vector.shape_cast %38 : vector<1xf32> to vector<1x1xf32>
      %cst_33 = arith.constant 1.000000e-24 : f32
      %40 = vector.broadcast %cst_33 : f32 to vector<1x1xf32>
      %41 = arith.maximumf %39, %40 : vector<1x1xf32>
      %42 = math.rsqrt %41 : vector<1x1xf32>
      %43 = vector.broadcast %42 : vector<1x1xf32> to vector<1x128xf32>
      %44 = arith.mulf %36, %43 : vector<1x128xf32>
      %c0_34 = arith.constant 0 : index
      %c0_35 = arith.constant 0 : index
      %c0_36 = arith.constant 0 : index
      %45 = vector.load %arg9[%c0_34, %c0_35, %c0_36] : memref<1x1x128xf32, #tpu.memory_space<vmem>>, vector<1x1x128xf32>
      %46 = vector.shape_cast %45 : vector<1x1x128xf32> to vector<1x128xf32>
      %47 = vector.shape_cast %44 : vector<1x128xf32> to vector<1x1x128xf32>
      tpu.vector_store %arg9[%c0_34, %c0_35, %c0_36], %47 {strides = array<i32>} : memref<1x1x128xf32, #tpu.memory_space<vmem>>, vector<1x1x128xf32>,
    } else {
    }
    return
  }
  func.func @transform_0(%arg0: i32, %arg1: i32) -> (i32, i32, i32) {
    %c0_i32 = arith.constant 0 : i32
    %c0_i32_0 = arith.constant 0 : i32
    return %arg0, %arg1, %c0_i32 : i32, i32, i32
  }
  func.func @transform_1(%arg0: i32, %arg1: i32) -> (i32, i32) {
    %c0_i32 = arith.constant 0 : i32
    %c0_i32_0 = arith.constant 0 : i32
    %c0_i32_1 = arith.constant 0 : i32
    return %c0_i32, %c0_i32_0 : i32, i32
  }
  func.func @transform_2(%arg0: i32, %arg1: i32) -> (i32, i32) {
    %c0_i32 = arith.constant 0 : i32
    %c0_i32_0 = arith.constant 0 : i32
    %c0_i32_1 = arith.constant 0 : i32
    return %c0_i32, %c0_i32_0 : i32, i32
  }
  func.func @transform_3(%arg0: i32, %arg1: i32) -> (i32, i32) {
    %c0_i32 = arith.constant 0 : i32
    %c0_i32_0 = arith.constant 0 : i32
    %c0_i32_1 = arith.constant 0 : i32
    return %c0_i32, %c0_i32_0 : i32, i32
  }
  func.func @transform_4(%arg0: i32, %arg1: i32) -> (i32, i32) {
    %c0_i32 = arith.constant 0 : i32
    %c0_i32_0 = arith.constant 0 : i32
    %c0_i32_1 = arith.constant 0 : i32
    return %c0_i32, %c0_i32_0 : i32, i32
  }
  func.func @transform_5(%arg0: i32, %arg1: i32) -> (i32, i32) {
    %c0_i32 = arith.constant 0 : i32
    %c0_i32_0 = arith.constant 0 : i32
    %c0_i32_1 = arith.constant 0 : i32
    return %c0_i32, %c0_i32_0 : i32, i32
  }
  func.func @transform_6(%arg0: i32, %arg1: i32) -> (i32, i32) {
    %c0_i32 = arith.constant 0 : i32
    %c0_i32_0 = arith.constant 0 : i32
    %c0_i32_1 = arith.constant 0 : i32
    return %c0_i32, %c0_i32_0 : i32, i32
  }
  func.func @transform_7(%arg0: i32, %arg1: i32) -> (i32, i32, i32) {
    %c0_i32 = arith.constant 0 : i32
    %c0_i32_0 = arith.constant 0 : i32
    %c0_i32_1 = arith.constant 0 : i32
    return %arg0, %c0_i32, %c0_i32_0 : i32, i32, i32
  }
}

</mosaic_0001>

<llo_original>
// kernel: inception_resnet_backbone_forward.1
$region0: #{inception_resnet_backbone_forward.1}
  #allocation0 [shape = 'u32[]', space=smem, size = 0x4, offset = 0x4, fixed_abs, tag = 'smem constant byte address 0x4 - core index']
  #allocation1 [shape = 'u32[144,128]{1,0:T(1,128)}', space=vmem, size = 0x12000, scoped, tag = 'internal scratch']
  #allocation2 [shape = 'f32[1,128]{1,0:T(1,128)}', space=vmem, size = 0x200, scoped, tag = 'scratch operand']
  %s0 = inlined_call_operand.vmem [shape: bf16[2,64,32], index: 0, kind: input, shape index: {}]
  %s1 = inlined_call_operand.vmem [shape: bf16[32,128], index: 1, kind: input, shape index: {}]
  %s2 = inlined_call_operand.vmem [shape: f32[1,128], index: 2, kind: input, shape index: {}]
  %s3 = inlined_call_operand.vmem [shape: bf16[128,512], index: 3, kind: input, shape index: {}]
  %s4 = inlined_call_operand.vmem [shape: f32[1,512], index: 4, kind: input, shape index: {}]
  %s5 = inlined_call_operand.vmem [shape: bf16[512,128], index: 5, kind: input, shape index: {}]
  %s6 = inlined_call_operand.vmem [shape: f32[1,128], index: 6, kind: input, shape index: {}]
  %s7 = inlined_call_operand.hbm [shape: f32[2,1,128], index: 7, kind: output, shape index: {}]
  %s8 = sld [smem:[#allocation0]]
  $region69: #{inception_resnet_backbone_forward.1} parent=0
    _
  %s10 = ssub.s32 1, %s8
  %s11 = scalar_select 0, %s10, %s8
  $region1: #{inception_resnet_backbone_forward.1} parent=0
    #allocation3 [shape = 'u8[1024]{0}', space=vmem, size = 0x400, scoped, tag = 'output window, operand 0']
    #allocation4 [shape = 's32[2]{0}', space=sflag, size = 0x8, scoped, tag = 'scoped memory for inception_resnet_backbone_forward.1']
    %12 = vsyncpa [#allocation4], 0
    %s13 = scalar_lea.sflag [#allocation4], 1
    %14 = vsyncpa %s13, 0
    loop: start=0, step=1, limit=4
    $region2: #{inception_resnet_backbone_forward.1} parent=1 // loop_pre_header
      _
    $region3: #{inception_resnet_backbone_forward.1} parent=1 // loop_header
      %s16 = sphi 0, %s20
      %p17 = scmp.ge.s32.totalorder %s16, 4
      %s23 = sphi 0, %s35
      %s24 = sphi 0, %s31
      %s25 = sphi 0, %s23
      %s26 = sphi 0, %s24
      %s27 = sphi 0, %s25
      %s28 = sphi 0, %s26
      %s40 = sphi 0, %s42
      %s43 = sphi 0, %s40
      %s44 = sphi 0, %s43
      %s60 = sphi 0, %s44
      %s64 = sphi 0, %s64
      %s66 = sphi 0, %s64
      %s67 = sphi 0, %s66
      %s81 = sphi 0, %s67
      %s85 = sphi 0, %s85
      %s87 = sphi 0, %s85
      %s88 = sphi 0, %s87
      %s102 = sphi 0, %s88
      %s106 = sphi 0, %s106
      %s108 = sphi 0, %s106
      %s109 = sphi 0, %s108
      %s123 = sphi 0, %s109
      %s127 = sphi 0, %s127
      %s129 = sphi 0, %s127
      %s130 = sphi 0, %s129
      %s144 = sphi 0, %s130
      %s148 = sphi 0, %s148
      %s150 = sphi 0, %s148
      %s151 = sphi 0, %s150
      %s165 = sphi 0, %s151
      %s169 = sphi 0, %s169
      %s171 = sphi 0, %s169
      %s172 = sphi 0, %s171
      %s186 = sphi 0, %s172
      %s192 = sphi 0, %s194
      %s195 = sphi 0, %s192
      %s196 = sphi 0, %s195
      %s212 = sphi 0, %s196
    $region4: #{inception_resnet_backbone_forward.1} parent=1 // loop_header_branch
      %19 = sbr.rel (%p17) target = $region8
    $region5: #{inception_resnet_backbone_forward.1} parent=1 // loop_body
      %s21 = ssub.s32 %s16, 1
      %s22 = ssub.s32 %s16, 2
      %s29 = sadd.s32 1, %s24
      %p30 = scmp.ge.s32.totalorder %s29, 1
      %s31 = scalar_select %p30, 0, %s29
      %s32 = sadd.s32 1, %s23
      %s33 = scalar_select %p30, %s32, %s23
      %p34 = scmp.ge.s32.totalorder %s33, 2
      %s35 = scalar_select %p34, 0, %s33
      %s36 = ssub.s32 %s23, %s35
      %s37 = ssub.s32 %s24, %s31
      %s38 = sor.u32 %s36, %s37
      %p39 = scmp.eq.s32.totalorder %s38, 0
      %s41 = sadd.s32 %s40, 1
      %s42 = scalar_select %p39, %s40, %s41
      %p45 = pneg %p39
      %p46 = scmp.eq.s32.totalorder %s16, 1
      %p47 = por %p45, %p46
      %p48 = scmp.ne.s32.totalorder %s40, %s43
      %p49 = scmp.eq.s32.totalorder %s16, 0
      %p50 = por %p48, %p49
      %p51 = scmp.ne.s32.totalorder %s40, %s43
      %p52 = scmp.eq.s32.totalorder %s21, 1
      %p53 = por %p51, %p52
      %p54 = scmp.ne.s32.totalorder %s43, %s44
      %p55 = scmp.eq.s32.totalorder %s21, 0
      %p56 = por %p54, %p55
      %p57 = scmp.ne.s32.totalorder %s43, %s44
      %p58 = scmp.eq.s32.totalorder %s22, 1
      %p59 = por %p57, %p58
      %p61 = scmp.ne.s32.totalorder %s44, %s60
      %p62 = scmp.eq.s32.totalorder %s22, 0
      %p63 = por %p61, %p62
      %s65 = sadd.s32 %s64, 1
      %p68 = scmp.eq.s32.totalorder %s16, 1
      %p69 = scmp.ne.s32.totalorder %s64, %s66
      %p70 = scmp.eq.s32.totalorder %s16, 0
      %p71 = por %p69, %p70
      %p72 = scmp.ne.s32.totalorder %s64, %s66
      %p73 = scmp.eq.s32.totalorder %s21, 1
      %p74 = por %p72, %p73
      %p75 = scmp.ne.s32.totalorder %s66, %s67
      %p76 = scmp.eq.s32.totalorder %s21, 0
      %p77 = por %p75, %p76
      %p78 = scmp.ne.s32.totalorder %s66, %s67
      %p79 = scmp.eq.s32.totalorder %s22, 1
      %p80 = por %p78, %p79
      %p82 = scmp.ne.s32.totalorder %s67, %s81
      %p83 = scmp.eq.s32.totalorder %s22, 0
      %p84 = por %p82, %p83
      %s86 = sadd.s32 %s85, 1
      %p89 = scmp.eq.s32.totalorder %s16, 1
      %p90 = scmp.ne.s32.totalorder %s85, %s87
      %p91 = scmp.eq.s32.totalorder %s16, 0
      %p92 = por %p90, %p91
      %p93 = scmp.ne.s32.totalorder %s85, %s87
      %p94 = scmp.eq.s32.totalorder %s21, 1
      %p95 = por %p93, %p94
      %p96 = scmp.ne.s32.totalorder %s87, %s88
      %p97 = scmp.eq.s32.totalorder %s21, 0
      %p98 = por %p96, %p97
      %p99 = scmp.ne.s32.totalorder %s87, %s88
      %p100 = scmp.eq.s32.totalorder %s22, 1
      %p101 = por %p99, %p100
      %p103 = scmp.ne.s32.totalorder %s88, %s102
      %p104 = scmp.eq.s32.totalorder %s22, 0
      %p105 = por %p103, %p104
      %s107 = sadd.s32 %s106, 1
      %p110 = scmp.eq.s32.totalorder %s16, 1
      %p111 = scmp.ne.s32.totalorder %s106, %s108
      %p112 = scmp.eq.s32.totalorder %s16, 0
      %p113 = por %p111, %p112
      %p114 = scmp.ne.s32.totalorder %s106, %s108
      %p115 = scmp.eq.s32.totalorder %s21, 1
      %p116 = por %p114, %p115
      %p117 = scmp.ne.s32.totalorder %s108, %s109
      %p118 = scmp.eq.s32.totalorder %s21, 0
      %p119 = por %p117, %p118
      %p120 = scmp.ne.s32.totalorder %s108, %s109
      %p121 = scmp.eq.s32.totalorder %s22, 1
      %p122 = por %p120, %p121
      %p124 = scmp.ne.s32.totalorder %s109, %s123
      %p125 = scmp.eq.s32.totalorder %s22, 0
      %p126 = por %p124, %p125
      %s128 = sadd.s32 %s127, 1
      %p131 = scmp.eq.s32.totalorder %s16, 1
      %p132 = scmp.ne.s32.totalorder %s127, %s129
      %p133 = scmp.eq.s32.totalorder %s16, 0
      %p134 = por %p132, %p133
      %p135 = scmp.ne.s32.totalorder %s127, %s129
      %p136 = scmp.eq.s32.totalorder %s21, 1
      %p137 = por %p135, %p136
      %p138 = scmp.ne.s32.totalorder %s129, %s130
      %p139 = scmp.eq.s32.totalorder %s21, 0
      %p140 = por %p138, %p139
      %p141 = scmp.ne.s32.totalorder %s129, %s130
      %p142 = scmp.eq.s32.totalorder %s22, 1
      %p143 = por %p141, %p142
      %p145 = scmp.ne.s32.totalorder %s130, %s144
      %p146 = scmp.eq.s32.totalorder %s22, 0
      %p147 = por %p145, %p146
      %s149 = sadd.s32 %s148, 1
      %p152 = scmp.eq.s32.totalorder %s16, 1
      %p153 = scmp.ne.s32.totalorder %s148, %s150
      %p154 = scmp.eq.s32.totalorder %s16, 0
      %p155 = por %p153, %p154
      %p156 = scmp.ne.s32.totalorder %s148, %s150
      %p157 = scmp.eq.s32.totalorder %s21, 1
      %p158 = por %p156, %p157
      %p159 = scmp.ne.s32.totalorder %s150, %s151
      %p160 = scmp.eq.s32.totalorder %s21, 0
      %p161 = por %p159, %p160
      %p162 = scmp.ne.s32.totalorder %s150, %s151
      %p163 = scmp.eq.s32.totalorder %s22, 1
      %p164 = por %p162, %p163
      %p166 = scmp.ne.s32.totalorder %s151, %s165
      %p167 = scmp.eq.s32.totalorder %s22, 0
      %p168 = por %p166, %p167
      %s170 = sadd.s32 %s169, 1
      %p173 = scmp.eq.s32.totalorder %s16, 1
      %p174 = scmp.ne.s32.totalorder %s169, %s171
      %p175 = scmp.eq.s32.totalorder %s16, 0
      %p176 = por %p174, %p175
      %p177 = scmp.ne.s32.totalorder %s169, %s171
      %p178 = scmp.eq.s32.totalorder %s21, 1
      %p179 = por %p177, %p178
      %p180 = scmp.ne.s32.totalorder %s171, %s172
      %p181 = scmp.eq.s32.totalorder %s21, 0
      %p182 = por %p180, %p181
      %p183 = scmp.ne.s32.totalorder %s171, %s172
      %p184 = scmp.eq.s32.totalorder %s22, 1
      %p185 = por %p183, %p184
      %p187 = scmp.ne.s32.totalorder %s172, %s186
      %p188 = scmp.eq.s32.totalorder %s22, 0
      %p189 = por %p187, %p188
      %s190 = ssub.s32 %s23, %s35
      %p191 = scmp.eq.s32.totalorder %s190, 0
      %s193 = sadd.s32 %s192, 1
      %s194 = scalar_select %p191, %s192, %s193
      %p197 = pneg %p191
      %p198 = scmp.eq.s32.totalorder %s16, 1
      %p199 = por %p197, %p198
      %p200 = scmp.ne.s32.totalorder %s192, %s195
      %p201 = scmp.eq.s32.totalorder %s16, 0
      %p202 = por %p200, %p201
      %p203 = scmp.ne.s32.totalorder %s192, %s195
      %p204 = scmp.eq.s32.totalorder %s21, 1
      %p205 = por %p203, %p204
      %p206 = scmp.ne.s32.totalorder %s195, %s196
      %p207 = scmp.eq.s32.totalorder %s21, 0
      %p208 = por %p206, %p207
      %p209 = scmp.ne.s32.totalorder %s195, %s196
      %p210 = scmp.eq.s32.totalorder %s22, 1
      %p211 = por %p209, %p210
      %p213 = scmp.ne.s32.totalorder %s196, %s212
      %p214 = scmp.eq.s32.totalorder %s22, 0
      %p215 = por %p213, %p214
      %p216 = scmp.le.s32.totalorder 1, %s16
      %p217 = scmp.lt.s32.totalorder %s16, 3
      %p218 = pnand %p216, %p217
      %p219 = pneg %p218
      // Predicated region
      $region9: #{inception_resnet_backbone_forward.1} parent=5 // pred_check
        _
      $region10: #{inception_resnet_backbone_forward.1} parent=5 // pred_check_branch
        %221 = sbr.rel (%p218) target = $region12
      $region11: #{inception_resnet_backbone_forward.1} parent=5 // pred_region
        %s222 = ssub.s32 %s16, 1
        // Predicated region
        $region13: #{inception_resnet_backbone_forward.1} parent=11 // pred_check
          %p223 = pneg %p77
        $region14: #{inception_resnet_backbone_forward.1} parent=11 // pred_check_branch
          %225 = sbr.rel (%p223) target = $region16
        $region15: #{inception_resnet_backbone_forward.1} parent=11 // pred_region
          _
        $region16: #{inception_resnet_backbone_forward.1} parent=11 // pred_fallthru
          _
        // Predicated region
        $region17: #{inception_resnet_backbone_forward.1} parent=11 // pred_check
          %p226 = pneg %p98
        $region18: #{inception_resnet_backbone_forward.1} parent=11 // pred_check_branch
          %228 = sbr.rel (%p226) target = $region20
        $region19: #{inception_resnet_backbone_forward.1} parent=11 // pred_region
          _
        $region20: #{inception_resnet_backbone_forward.1} parent=11 // pred_fallthru
          _
        // Predicated region
        $region21: #{inception_resnet_backbone_forward.1} parent=11 // pred_check
          %p229 = pneg %p119
        $region22: #{inception_resnet_backbone_forward.1} parent=11 // pred_check_branch
          %231 = sbr.rel (%p229) target = $region24
        $region23: #{inception_resnet_backbone_forward.1} parent=11 // pred_region
          _
        $region24: #{inception_resnet_backbone_forward.1} parent=11 // pred_fallthru
          _
        // Predicated region
        $region25: #{inception_resnet_backbone_forward.1} parent=11 // pred_check
          %p232 = pneg %p140
        $region26: #{inception_resnet_backbone_forward.1} parent=11 // pred_check_branch
          %234 = sbr.rel (%p232) target = $region28
        $region27: #{inception_resnet_backbone_forward.1} parent=11 // pred_region
          _
        $region28: #{inception_resnet_backbone_forward.1} parent=11 // pred_fallthru
          _
        // Predicated region
        $region29: #{inception_resnet_backbone_forward.1} parent=11 // pred_check
          %p235 = pneg %p161
        $region30: #{inception_resnet_backbone_forward.1} parent=11 // pred_check_branch
          %237 = sbr.rel (%p235) target = $region32
        $region31: #{inception_resnet_backbone_forward.1} parent=11 // pred_region
          _
        $region32: #{inception_resnet_backbone_forward.1} parent=11 // pred_fallthru
          _
        // Predicated region
        $region33: #{inception_resnet_backbone_forward.1} parent=11 // pred_check
          %p238 = pneg %p182
        $region34: #{inception_resnet_backbone_forward.1} parent=11 // pred_check_branch
          %240 = sbr.rel (%p238) target = $region36
        $region35: #{inception_resnet_backbone_forward.1} parent=11 // pred_region
          _
        $region36: #{inception_resnet_backbone_forward.1} parent=11 // pred_fallthru
          _
      $region12: #{inception_resnet_backbone_forward.1} parent=5 // pred_fallthru
        _
      %p241 = scmp.lt.s32.totalorder %s16, 2
      // Predicated region
      $region37: #{inception_resnet_backbone_forward.1} parent=5 // pred_check
        %p242 = pneg %p241
      $region38: #{inception_resnet_backbone_forward.1} parent=5 // pred_check_branch
        %244 = sbr.rel (%p242) target = $region40
      $region39: #{inception_resnet_backbone_forward.1} parent=5 // pred_region
        // Predicated region
        $region41: #{inception_resnet_backbone_forward.1} parent=39 // pred_check
          %p245 = pneg %p50
        $region42: #{inception_resnet_backbone_forward.1} parent=39 // pred_check_branch
          %247 = sbr.rel (%p245) target = $region44
        $region43: #{inception_resnet_backbone_forward.1} parent=39 // pred_region
          %s248 = smul.u32 8, %s24
          %p249 = scmp.lt.s32.totalorder %s23, 1
          %s250 = scalar_select %p249, %s23, 1
          %p251 = scmp.lt.s32.totalorder %s248, 7
          %s252 = scalar_select %p251, %s248, 7
          %s253 = smul.addr %s250, 8
          %s254 = sadd.s32 %s252, %s253
          %s255 = smul.addr %s254, 4
          %s256 = scalar_lea.vmem %s0, %s255
          %s257 = smul.u32 8, %s24
        $region44: #{inception_resnet_backbone_forward.1} parent=39 // pred_fallthru
          _
      $region40: #{inception_resnet_backbone_forward.1} parent=5 // pred_fallthru
        _
      %p258 = scmp.le.s32.totalorder 1, %s16
      %p259 = scmp.lt.s32.totalorder %s16, 3
      %p260 = pnand %p258, %p259
      %p261 = pneg %p260
      // Predicated region
      $region45: #{inception_resnet_backbone_forward.1} parent=5 // pred_check
        _
      $region46: #{inception_resnet_backbone_forward.1} parent=5 // pred_check_branch
        %263 = sbr.rel (%p260) target = $region48
      $region47: #{inception_resnet_backbone_forward.1} parent=5 // pred_region
        %s264 = ssub.s32 %s16, 1
        %s265 = smul.u32 8, %s26
        %p266 = scmp.lt.s32.totalorder %s25, 1
        %s267 = scalar_select %p266, %s25, 1
        %p268 = scmp.lt.s32.totalorder %s265, 7
        %s269 = scalar_select %p268, %s265, 7
        %s270 = smul.addr %s267, 8
        %s271 = sadd.s32 %s269, %s270
        %s272 = smul.addr %s271, 4
        %s273 = scalar_lea.vmem %s0, %s272
        %p274 = pneg %p56
        %p275 = pneg %p53
        %p276 = pneg %p77
        %p277 = pneg %p74
        %p278 = pneg %p98
        %p279 = pneg %p95
        %p280 = pneg %p119
        %p281 = pneg %p116
        %p282 = pneg %p140
        %p283 = pneg %p137
        %p284 = pneg %p161
        %p285 = pneg %p158
        %p286 = pneg %p182
        %p287 = pneg %p179
        %p288 = pneg %p208
        %p289 = pneg %p205
        %s290 = sand.u32 %s195, 1
        %s291 = scalar_lea.sflag [#allocation4], %s290
        %s292 = sand.u32 %s195, 1
        %s293 = scalar_lea.vmem [#allocation3], %s292
        %s294 = smul.u32 8, %s26
        %p295 = scmp.lt.s32.totalorder %s25, 1
        %s296 = scalar_select %p295, %s25, 1
        %p297 = scmp.lt.s32.totalorder %s294, 7
        %s298 = scalar_select %p297, %s294, 7
        %s299 = smul.addr %s296, 8
        %s300 = sadd.s32 %s298, %s299
        %s301 = smul.addr %s300, 4
        %s302 = scalar_lea.vmem %s0, %s301
        %s303 = smul.u32 8, %s26
        %p305 = scmp.eq.s32.totalorder %s26, 0
        // Predicated region
        $region49: #{inception_resnet_backbone_forward.1} parent=47 // pred_check
          %p306 = pneg %p305
        $region50: #{inception_resnet_backbone_forward.1} parent=47 // pred_check_branch
          %308 = sbr.rel (%p306) target = $region52
        $region51: #{inception_resnet_backbone_forward.1} parent=47 // pred_region
          %309 = vst [vmem:[#allocation2] sm:$0x1] 0.0
        $region52: #{inception_resnet_backbone_forward.1} parent=47 // pred_fallthru
          _
        %v310 = vld [vmem:[%s302] sm:$0xf]
        %v311 = vld [vmem:[%s302 + $0x4] sm:$0xf]
        %v312 = vld [vmem:[%s302 + $0x8] sm:$0xf]
        %v313 = vld [vmem:[%s302 + $0xc] sm:$0xf]
        %v314 = vld [vmem:[%s302 + $0x10] sm:$0xf]
        %v315 = vld [vmem:[%s302 + $0x14] sm:$0xf]
        %v316 = vld [vmem:[%s302 + $0x18] sm:$0xf]
        %v317 = vld [vmem:[%s302 + $0x1c] sm:$0xf]
        %v318 = vld [vmem:[%s1] sm:$0xf]
        %v319 = vld [vmem:[%s1 + $0x4] sm:$0xf]
        %v320 = vld [vmem:[%s1 + $0x8] sm:$0xf]
        %v321 = vld [vmem:[%s1 + $0xc] sm:$0xf]
        %v322 = vld [vmem:[%s2] sm:$0x1]
        %v324 = vlaneseq
        %v325 = vshrl.u32 %v324, 7
        %v326 = vsub.s32 0, %v325
        %v327 = vrot.slane %v322, %v326
        %v337 = vunpack.c.l.b16 %v310
        %v338 = vunpack.c.l.b16 %v311
        %v339 = vunpack.c.l.b16 %v312
        %v340 = vunpack.c.l.b16 %v313
        %v341 = vunpack.c.l.b16 %v314
        %v342 = vunpack.c.l.b16 %v315
        %v343 = vunpack.c.l.b16 %v316
        %v344 = vunpack.c.l.b16 %v317
        %v345 = vpack.c.b16 %v338, %v337
        %v346 = vpack.c.b16 %v340, %v339
        %v347 = vpack.c.b16 %v342, %v341
        %v348 = vpack.c.b16 %v344, %v343
        %v353 = vunpack.c.l.b16 %v318
        %v354 = vunpack.c.l.b16 %v319
        %v355 = vunpack.c.l.b16 %v320
        %v356 = vunpack.c.l.b16 %v321
        %v357 = vpack.c.b16 %v354, %v353
        %v358 = vpack.c.b16 %v356, %v355
        %vm361 = vcmask 261120
        %v363 = vsel %vm361, %v345, 0
        %v366 = vsel %vm361, %v346, 0
        %v369 = vsel %vm361, %v347, 0
        %v372 = vsel %vm361, %v348, 0
        %374 = vmatprep.subr.bf16.mxu0 0
        %375 = vmatpush1.bf16.msra.mxu0 0
        %376 = vmatprep.subr.bf16.mxu0 0
        %377 = vmatpush1.bf16.msra.mxu0 0
        %378 = vmatprep.subr.bf16.mxu0 0
        %379 = vmatpush1.bf16.msra.mxu0 0
        %380 = vmatprep.subr.bf16.mxu0 0
        %381 = vmatpush1.bf16.msra.mxu0 0
        %382 = vmatprep.subr.bf16.mxu0 0
        %383 = vmatpush1.bf16.msra.mxu0 0
        %384 = vmatprep.subr.bf16.mxu0 0
        %385 = vmatpush1.bf16.msra.mxu0 0
        %386 = vmatprep.subr.bf16.mxu0 0
        %387 = vmatpush1.bf16.msra.mxu0 %v358
        %388 = vmatprep.subr.bf16.mxu0 0
        %389 = vmatpush1.bf16.msra.mxu0 %v357
        %390 = vmatprep.subr.bf16.mxu0 0
        %391 = vmatpush2.bf16.msra.mxu0 0
        %392 = vmatprep.subr.bf16.mxu0 0
        %393 = vmatpush2.bf16.msra.mxu0 0
        %394 = vmatprep.subr.bf16.mxu0 0
        %395 = vmatpush2.bf16.msra.mxu0 0
        %396 = vmatprep.subr.bf16.mxu0 0
        %397 = vmatpush2.bf16.msra.mxu0 0
        %398 = vmatprep.subr.bf16.mxu0 0
        %399 = vmatpush2.bf16.msra.mxu0 0
        %400 = vmatprep.subr.bf16.mxu0 0
        %401 = vmatpush2.bf16.msra.mxu0 0
        %402 = vmatprep.subr.bf16.mxu0 0
        %403 = vmatpush2.bf16.msra.mxu0 0
        %404 = vmatprep.subr.bf16.mxu0 0
        %405 = vmatpush2.bf16.msra.mxu0 0
        %406 = vmatprep.mubr.bf16.mxu0 0
        %407 = vmatmul.mubr.bf16.gmra.mxu0 %v363
        %v408 = vpop.f32.mrf.mxu0
        %v409 = vadd.f32 %v327, %v408
        %v410 = vpop.f32.mrf.mxu0
        %v411 = vpop.f32.mrf.mxu0
        %v412 = vadd.f32 %v327, %v411
        %v413 = vpop.f32.mrf.mxu0
        %414 = vmatprep.mubr.bf16.mxu0 0
        %415 = vmatmul.mubr.bf16.gmra.mxu0 %v366
        %v416 = vpop.f32.mrf.mxu0
        %v417 = vadd.f32 %v327, %v416
        %v418 = vpop.f32.mrf.mxu0
        %v419 = vpop.f32.mrf.mxu0
        %v420 = vadd.f32 %v327, %v419
        %v421 = vpop.f32.mrf.mxu0
        %422 = vmatprep.mubr.bf16.mxu0 0
        %423 = vmatmul.mubr.bf16.gmra.mxu0 %v369
        %v424 = vpop.f32.mrf.mxu0
        %v425 = vadd.f32 %v327, %v424
        %v426 = vpop.f32.mrf.mxu0
        %v427 = vpop.f32.mrf.mxu0
        %v428 = vadd.f32 %v327, %v427
        %v429 = vpop.f32.mrf.mxu0
        %430 = vmatprep.mubr.bf16.mxu0 0
        %431 = vmatmul.mubr.bf16.gmra.mxu0 %v372
        %v432 = vpop.f32.mrf.mxu0
        %v433 = vadd.f32 %v327, %v432
        %v434 = vpop.f32.mrf.mxu0
        %v435 = vpop.f32.mrf.mxu0
        %v436 = vadd.f32 %v327, %v435
        %v437 = vpop.f32.mrf.mxu0
        %438 = vdwg.mxu0
        %v439 = vmax.f32 %v409, 0.0
        %v440 = vmax.f32 %v412, 0.0
        %v441 = vmax.f32 %v417, 0.0
        %v442 = vmax.f32 %v420, 0.0
        %v443 = vmax.f32 %v425, 0.0
        %v444 = vmax.f32 %v428, 0.0
        %v445 = vmax.f32 %v433, 0.0
        %v446 = vmax.f32 %v436, 0.0
        %v447 = vld [vmem:[#allocation2] sm:$0x1]
        %v448 = vadd.f32 %v439, %v440
        %v449 = vadd.f32 %v448, %v441
        %v450 = vadd.f32 %v449, %v442
        %v451 = vadd.f32 %v450, %v443
        %v452 = vadd.f32 %v451, %v444
        %v453 = vadd.f32 %v452, %v445
        %v454 = vadd.f32 %v453, %v446
        %v455 = vrot.slane %v454, 4
        %v456 = vadd.f32 %v454, %v455
        %v457 = vrot.slane %v456, 2
        %v458 = vadd.f32 %v456, %v457
        %v459 = vrot.slane %v458, 1
        %v460 = vadd.f32 %v458, %v459
        %v461 = vadd.f32 %v447, %v460
        %462 = vst [vmem:[#allocation2] sm:$0x1] %v461
        // Predicated region
        $region53: #{inception_resnet_backbone_forward.1} parent=47 // pred_check
          %p463 = pneg %p305
        $region54: #{inception_resnet_backbone_forward.1} parent=47 // pred_check_branch
          %465 = sbr.rel (%p463) target = $region56
        $region55: #{inception_resnet_backbone_forward.1} parent=47 // pred_region
          %v466 = vld [vmem:[#allocation2] sm:$0x1]
          %v467 = vld [vmem:[%s2] sm:$0x1]
          %v468 = vmax.f32 %v467, 0.0
          %v469 = vmul.f32 %v468, 15.0
          %v470 = vsub.f32 %v466, %v469
          %v471 = vmul.f32 %v470, 0.020408163
          %v472 = vld [vmem:[%s3] sm:$0xff]
          %v473 = vld [vmem:[%s3 + $0x8] sm:$0xff]
          %v474 = vld [vmem:[%s3 + $0x10] sm:$0xff]
          %v475 = vld [vmem:[%s3 + $0x18] sm:$0xff]
          %v476 = vld [vmem:[%s3 + $0x20] sm:$0xff]
          %v477 = vld [vmem:[%s3 + $0x28] sm:$0xff]
          %v478 = vld [vmem:[%s3 + $0x30] sm:$0xff]
          %v479 = vld [vmem:[%s3 + $0x38] sm:$0xff]
          %v480 = vld [vmem:[%s3 + $0x40] sm:$0xff]
          %v481 = vld [vmem:[%s3 + $0x48] sm:$0xff]
          %v482 = vld [vmem:[%s3 + $0x50] sm:$0xff]
          %v483 = vld [vmem:[%s3 + $0x58] sm:$0xff]
          %v484 = vld [vmem:[%s3 + $0x60] sm:$0xff]
          %v485 = vld [vmem:[%s3 + $0x68] sm:$0xff]
          %v486 = vld [vmem:[%s3 + $0x70] sm:$0xff]
          %v487 = vld [vmem:[%s3 + $0x78] sm:$0xff]
          %v488 = vld [vmem:[%s3 + $0x80] sm:$0xff]
          %v489 = vld [vmem:[%s3 + $0x88] sm:$0xff]
          %v490 = vld [vmem:[%s3 + $0x90] sm:$0xff]
          %v491 = vld [vmem:[%s3 + $0x98] sm:$0xff]
          %v492 = vld [vmem:[%s3 + $0xa0] sm:$0xff]
          %v493 = vld [vmem:[%s3 + $0xa8] sm:$0xff]
          %v494 = vld [vmem:[%s3 + $0xb0] sm:$0xff]
          %v495 = vld [vmem:[%s3 + $0xb8] sm:$0xff]
          %v496 = vld [vmem:[%s3 + $0xc0] sm:$0xff]
          %v497 = vld [vmem:[%s3 + $0xc8] sm:$0xff]
          %v498 = vld [vmem:[%s3 + $0xd0] sm:$0xff]
          %v499 = vld [vmem:[%s3 + $0xd8] sm:$0xff]
          %v500 = vld [vmem:[%s3 + $0xe0] sm:$0xff]
          %v501 = vld [vmem:[%s3 + $0xe8] sm:$0xff]
          %v502 = vld [vmem:[%s3 + $0xf0] sm:$0xff]
          %v503 = vld [vmem:[%s3 + $0xf8] sm:$0xff]
          %v504 = vld [vmem:[%s4] sm:$0xf]
          %v537 = vunpack.c.l.b16 %v472
          %v538 = vunpack.c.h.b16 %v472
          %v539 = vunpack.c.l.b16 %v473
          %v540 = vunpack.c.h.b16 %v473
          %v541 = vunpack.c.l.b16 %v474
          %v542 = vunpack.c.h.b16 %v474
          %v543 = vunpack.c.l.b16 %v475
          %v544 = vunpack.c.h.b16 %v475
          %v545 = vunpack.c.l.b16 %v476
          %v546 = vunpack.c.h.b16 %v476
          %v547 = vunpack.c.l.b16 %v477
          %v548 = vunpack.c.h.b16 %v477
          %v549 = vunpack.c.l.b16 %v478
          %v550 = vunpack.c.h.b16 %v478
          %v551 = vunpack.c.l.b16 %v479
          %v552 = vunpack.c.h.b16 %v479
          %v553 = vunpack.c.l.b16 %v480
          %v554 = vunpack.c.h.b16 %v480
          %v555 = vunpack.c.l.b16 %v481
          %v556 = vunpack.c.h.b16 %v481
          %v557 = vunpack.c.l.b16 %v482
          %v558 = vunpack.c.h.b16 %v482
          %v559 = vunpack.c.l.b16 %v483
          %v560 = vunpack.c.h.b16 %v483
          %v561 = vunpack.c.l.b16 %v484
          %v562 = vunpack.c.h.b16 %v484
          %v563 = vunpack.c.l.b16 %v485
          %v564 = vunpack.c.h.b16 %v485
          %v565 = vunpack.c.l.b16 %v486
          %v566 = vunpack.c.h.b16 %v486
          %v567 = vunpack.c.l.b16 %v487
          %v568 = vunpack.c.h.b16 %v487
          %v569 = vunpack.c.l.b16 %v488
          %v570 = vunpack.c.h.b16 %v488
          %v571 = vunpack.c.l.b16 %v489
          %v572 = vunpack.c.h.b16 %v489
          %v573 = vunpack.c.l.b16 %v490
          %v574 = vunpack.c.h.b16 %v490
          %v575 = vunpack.c.l.b16 %v491
          %v576 = vunpack.c.h.b16 %v491
          %v577 = vunpack.c.l.b16 %v492
          %v578 = vunpack.c.h.b16 %v492
          %v579 = vunpack.c.l.b16 %v493
          %v580 = vunpack.c.h.b16 %v493
          %v581 = vunpack.c.l.b16 %v494
          %v582 = vunpack.c.h.b16 %v494
          %v583 = vunpack.c.l.b16 %v495
          %v584 = vunpack.c.h.b16 %v495
          %v585 = vunpack.c.l.b16 %v496
          %v586 = vunpack.c.h.b16 %v496
          %v587 = vunpack.c.l.b16 %v497
          %v588 = vunpack.c.h.b16 %v497
          %v589 = vunpack.c.l.b16 %v498
          %v590 = vunpack.c.h.b16 %v498
          %v591 = vunpack.c.l.b16 %v499
          %v592 = vunpack.c.h.b16 %v499
          %v593 = vunpack.c.l.b16 %v500
          %v594 = vunpack.c.h.b16 %v500
          %v595 = vunpack.c.l.b16 %v501
          %v596 = vunpack.c.h.b16 %v501
          %v597 = vunpack.c.l.b16 %v502
          %v598 = vunpack.c.h.b16 %v502
          %v599 = vunpack.c.l.b16 %v503
          %v600 = vunpack.c.h.b16 %v503
          %v601 = vpack.c.b16 %v541, %v537
          %v602 = vpack.c.b16 %v542, %v538
          %v603 = vpack.c.b16 %v543, %v539
          %v604 = vpack.c.b16 %v544, %v540
          %v605 = vpack.c.b16 %v549, %v545
          %v606 = vpack.c.b16 %v550, %v546
          %v607 = vpack.c.b16 %v551, %v547
          %v608 = vpack.c.b16 %v552, %v548
          %v609 = vpack.c.b16 %v557, %v553
          %v610 = vpack.c.b16 %v558, %v554
          %v611 = vpack.c.b16 %v559, %v555
          %v612 = vpack.c.b16 %v560, %v556
          %v613 = vpack.c.b16 %v565, %v561
          %v614 = vpack.c.b16 %v566, %v562
          %v615 = vpack.c.b16 %v567, %v563
          %v616 = vpack.c.b16 %v568, %v564
          %v617 = vpack.c.b16 %v573, %v569
          %v618 = vpack.c.b16 %v574, %v570
          %v619 = vpack.c.b16 %v575, %v571
          %v620 = vpack.c.b16 %v576, %v572
          %v621 = vpack.c.b16 %v581, %v577
          %v622 = vpack.c.b16 %v582, %v578
          %v623 = vpack.c.b16 %v583, %v579
          %v624 = vpack.c.b16 %v584, %v580
          %v625 = vpack.c.b16 %v589, %v585
          %v626 = vpack.c.b16 %v590, %v586
          %v627 = vpack.c.b16 %v591, %v587
          %v628 = vpack.c.b16 %v592, %v588
          %v629 = vpack.c.b16 %v597, %v593
          %v630 = vpack.c.b16 %v598, %v594
          %v631 = vpack.c.b16 %v599, %v595
          %v632 = vpack.c.b16 %v600, %v596
          %v666 = vlaneseq
          %v667 = vshrl.u32 %v666, 7
          %v668 = vsub.s32 0, %v667
          %v669 = vrot.slane %v504, %v668
          %v670 = vlaneseq
          %v671 = vshrl.u32 %v670, 7
          %v672 = vsub.s32 1, %v671
          %v673 = vrot.slane %v504, %v672
          %v674 = vlaneseq
          %v675 = vshrl.u32 %v674, 7
          %v676 = vsub.s32 2, %v675
          %v677 = vrot.slane %v504, %v676
          %v678 = vlaneseq
          %v679 = vshrl.u32 %v678, 7
          %v680 = vsub.s32 3, %v679
          %v681 = vrot.slane %v504, %v680
          %686 = vmatprep.subr.bf16.mxu0 %v630
          %687 = vmatpush1.bf16.msra.mxu0 %v629
          %688 = vmatprep.subr.bf16.mxu0 %v626
          %689 = vmatpush1.bf16.msra.mxu0 %v625
          %690 = vmatprep.subr.bf16.mxu0 %v622
          %691 = vmatpush1.bf16.msra.mxu0 %v621
          %692 = vmatprep.subr.bf16.mxu0 %v618
          %693 = vmatpush1.bf16.msra.mxu0 %v617
          %694 = vmatprep.subr.bf16.mxu0 %v614
          %695 = vmatpush1.bf16.msra.mxu0 %v613
          %696 = vmatprep.subr.bf16.mxu0 %v610
          %697 = vmatpush1.bf16.msra.mxu0 %v609
          %698 = vmatprep.subr.bf16.mxu0 %v606
          %699 = vmatpush1.bf16.msra.mxu0 %v605
          %700 = vmatprep.subr.bf16.mxu0 %v602
          %701 = vmatpush1.bf16.msra.mxu0 %v601
          %702 = vmatprep.subr.bf16.mxu0 0
          %703 = vmatpush2.bf16.msra.mxu0 0
          %704 = vmatprep.subr.bf16.mxu0 0
          %705 = vmatpush2.bf16.msra.mxu0 0
          %706 = vmatprep.subr.bf16.mxu0 0
          %707 = vmatpush2.bf16.msra.mxu0 0
          %708 = vmatprep.subr.bf16.mxu0 0
          %709 = vmatpush2.bf16.msra.mxu0 0
          %710 = vmatprep.subr.bf16.mxu0 0
          %711 = vmatpush2.bf16.msra.mxu0 0
          %712 = vmatprep.subr.bf16.mxu0 0
          %713 = vmatpush2.bf16.msra.mxu0 0
          %714 = vmatprep.subr.bf16.mxu0 0
          %715 = vmatpush2.bf16.msra.mxu0 0
          %716 = vmatprep.subr.bf16.mxu0 0
          %717 = vmatpush2.bf16.msra.mxu0 0
          %718 = vmatprep.mubr.f32.mxu0 0.0
          %719 = vmatmul.mubr.f32.gmra.mxu0 %v471
          %v720 = vpop.f32.mrf.mxu0
          %v721 = vadd.f32 %v669, %v720
          %v722 = vpop.f32.mrf.mxu0
          %v723 = vadd.f32 %v673, %v722
          %724 = vdwg.mxu0
          %725 = vmatprep.subr.bf16.mxu0 %v632
          %726 = vmatpush1.bf16.msra.mxu0 %v631
          %727 = vmatprep.subr.bf16.mxu0 %v628
          %728 = vmatpush1.bf16.msra.mxu0 %v627
          %729 = vmatprep.subr.bf16.mxu0 %v624
          %730 = vmatpush1.bf16.msra.mxu0 %v623
          %731 = vmatprep.subr.bf16.mxu0 %v620
          %732 = vmatpush1.bf16.msra.mxu0 %v619
          %733 = vmatprep.subr.bf16.mxu0 %v616
          %734 = vmatpush1.bf16.msra.mxu0 %v615
          %735 = vmatprep.subr.bf16.mxu0 %v612
          %736 = vmatpush1.bf16.msra.mxu0 %v611
          %737 = vmatprep.subr.bf16.mxu0 %v608
          %738 = vmatpush1.bf16.msra.mxu0 %v607
          %739 = vmatprep.subr.bf16.mxu0 %v604
          %740 = vmatpush1.bf16.msra.mxu0 %v603
          %741 = vmatprep.subr.bf16.mxu0 0
          %742 = vmatpush2.bf16.msra.mxu0 0
          %743 = vmatprep.subr.bf16.mxu0 0
          %744 = vmatpush2.bf16.msra.mxu0 0
          %745 = vmatprep.subr.bf16.mxu0 0
          %746 = vmatpush2.bf16.msra.mxu0 0
          %747 = vmatprep.subr.bf16.mxu0 0
          %748 = vmatpush2.bf16.msra.mxu0 0
          %749 = vmatprep.subr.bf16.mxu0 0
          %750 = vmatpush2.bf16.msra.mxu0 0
          %751 = vmatprep.subr.bf16.mxu0 0
          %752 = vmatpush2.bf16.msra.mxu0 0
          %753 = vmatprep.subr.bf16.mxu0 0
          %754 = vmatpush2.bf16.msra.mxu0 0
          %755 = vmatprep.subr.bf16.mxu0 0
          %756 = vmatpush2.bf16.msra.mxu0 0
          %757 = vmatprep.mubr.f32.mxu0 0.0
          %758 = vmatmul.mubr.f32.gmra.mxu0 %v471
          %v759 = vpop.f32.mrf.mxu0
          %v760 = vadd.f32 %v677, %v759
          %v761 = vpop.f32.mrf.mxu0
          %v762 = vadd.f32 %v681, %v761
          %763 = vdwg.mxu0
          %v764 = vld [vmem:[%s5] sm:$0xf]
          %v765 = vld [vmem:[%s5 + $0x4] sm:$0xf]
          %v766 = vld [vmem:[%s5 + $0x8] sm:$0xf]
          %v767 = vld [vmem:[%s5 + $0xc] sm:$0xf]
          %v768 = vld [vmem:[%s5 + $0x10] sm:$0xf]
          %v769 = vld [vmem:[%s5 + $0x14] sm:$0xf]
          %v770 = vld [vmem:[%s5 + $0x18] sm:$0xf]
          %v771 = vld [vmem:[%s5 + $0x1c] sm:$0xf]
          %v772 = vld [vmem:[%s5 + $0x20] sm:$0xf]
          %v773 = vld [vmem:[%s5 + $0x24] sm:$0xf]
          %v774 = vld [vmem:[%s5 + $0x28] sm:$0xf]
          %v775 = vld [vmem:[%s5 + $0x2c] sm:$0xf]
          %v776 = vld [vmem:[%s5 + $0x30] sm:$0xf]
          %v777 = vld [vmem:[%s5 + $0x34] sm:$0xf]
          %v778 = vld [vmem:[%s5 + $0x38] sm:$0xf]
          %v779 = vld [vmem:[%s5 + $0x3c] sm:$0xf]
          %v780 = vld [vmem:[%s5 + $0x40] sm:$0xf]
          %v781 = vld [vmem:[%s5 + $0x44] sm:$0xf]
          %v782 = vld [vmem:[%s5 + $0x48] sm:$0xf]
          %v783 = vld [vmem:[%s5 + $0x4c] sm:$0xf]
          %v784 = vld [vmem:[%s5 + $0x50] sm:$0xf]
          %v785 = vld [vmem:[%s5 + $0x54] sm:$0xf]
          %v786 = vld [vmem:[%s5 + $0x58] sm:$0xf]
          %v787 = vld [vmem:[%s5 + $0x5c] sm:$0xf]
          %v788 = vld [vmem:[%s5 + $0x60] sm:$0xf]
          %v789 = vld [vmem:[%s5 + $0x64] sm:$0xf]
          %v790 = vld [vmem:[%s5 + $0x68] sm:$0xf]
          %v791 = vld [vmem:[%s5 + $0x6c] sm:$0xf]
          %v792 = vld [vmem:[%s5 + $0x70] sm:$0xf]
          %v793 = vld [vmem:[%s5 + $0x74] sm:$0xf]
          %v794 = vld [vmem:[%s5 + $0x78] sm:$0xf]
          %v795 = vld [vmem:[%s5 + $0x7c] sm:$0xf]
          %v796 = vld [vmem:[%s5 + $0x80] sm:$0xf]
          %v797 = vld [vmem:[%s5 + $0x84] sm:$0xf]
          %v798 = vld [vmem:[%s5 + $0x88] sm:$0xf]
          %v799 = vld [vmem:[%s5 + $0x8c] sm:$0xf]
          %v800 = vld [vmem:[%s5 + $0x90] sm:$0xf]
          %v801 = vld [vmem:[%s5 + $0x94] sm:$0xf]
          %v802 = vld [vmem:[%s5 + $0x98] sm:$0xf]
          %v803 = vld [vmem:[%s5 + $0x9c] sm:$0xf]
          %v804 = vld [vmem:[%s5 + $0xa0] sm:$0xf]
          %v805 = vld [vmem:[%s5 + $0xa4] sm:$0xf]
          %v806 = vld [vmem:[%s5 + $0xa8] sm:$0xf]
          %v807 = vld [vmem:[%s5 + $0xac] sm:$0xf]
          %v808 = vld [vmem:[%s5 + $0xb0] sm:$0xf]
          %v809 = vld [vmem:[%s5 + $0xb4] sm:$0xf]
          %v810 = vld [vmem:[%s5 + $0xb8] sm:$0xf]
          %v811 = vld [vmem:[%s5 + $0xbc] sm:$0xf]
          %v812 = vld [vmem:[%s5 + $0xc0] sm:$0xf]
          %v813 = vld [vmem:[%s5 + $0xc4] sm:$0xf]
          %v814 = vld [vmem:[%s5 + $0xc8] sm:$0xf]
          %v815 = vld [vmem:[%s5 + $0xcc] sm:$0xf]
          %v816 = vld [vmem:[%s5 + $0xd0] sm:$0xf]
          %v817 = vld [vmem:[%s5 + $0xd4] sm:$0xf]
          %v818 = vld [vmem:[%s5 + $0xd8] sm:$0xf]
          %v819 = vld [vmem:[%s5 + $0xdc] sm:$0xf]
          %v820 = vld [vmem:[%s5 + $0xe0] sm:$0xf]
          %v821 = vld [vmem:[%s5 + $0xe4] sm:$0xf]
          %v822 = vld [vmem:[%s5 + $0xe8] sm:$0xf]
          %v823 = vld [vmem:[%s5 + $0xec] sm:$0xf]
          %v824 = vld [vmem:[%s5 + $0xf0] sm:$0xf]
          %v825 = vld [vmem:[%s5 + $0xf4] sm:$0xf]
          %v826 = vld [vmem:[%s5 + $0xf8] sm:$0xf]
          %v827 = vld [vmem:[%s5 + $0xfc] sm:$0xf]
          %v828 = vld [vmem:[%s6] sm:$0x1]
          %v893 = vunpack.c.l.b16 %v764
          %v894 = vunpack.c.l.b16 %v765
          %v895 = vunpack.c.l.b16 %v766
          %v896 = vunpack.c.l.b16 %v767
          %v897 = vunpack.c.l.b16 %v768
          %v898 = vunpack.c.l.b16 %v769
          %v899 = vunpack.c.l.b16 %v770
          %v900 = vunpack.c.l.b16 %v771
          %v901 = vunpack.c.l.b16 %v772
          %v902 = vunpack.c.l.b16 %v773
          %v903 = vunpack.c.l.b16 %v774
          %v904 = vunpack.c.l.b16 %v775
          %v905 = vunpack.c.l.b16 %v776
          %v906 = vunpack.c.l.b16 %v777
          %v907 = vunpack.c.l.b16 %v778
          %v908 = vunpack.c.l.b16 %v779
          %v909 = vunpack.c.l.b16 %v780
          %v910 = vunpack.c.l.b16 %v781
          %v911 = vunpack.c.l.b16 %v782
          %v912 = vunpack.c.l.b16 %v783
          %v913 = vunpack.c.l.b16 %v784
          %v914 = vunpack.c.l.b16 %v785
          %v915 = vunpack.c.l.b16 %v786
          %v916 = vunpack.c.l.b16 %v787
          %v917 = vunpack.c.l.b16 %v788
          %v918 = vunpack.c.l.b16 %v789
          %v919 = vunpack.c.l.b16 %v790
          %v920 = vunpack.c.l.b16 %v791
          %v921 = vunpack.c.l.b16 %v792
          %v922 = vunpack.c.l.b16 %v793
          %v923 = vunpack.c.l.b16 %v794
          %v924 = vunpack.c.l.b16 %v795
          %v925 = vunpack.c.l.b16 %v796
          %v926 = vunpack.c.l.b16 %v797
          %v927 = vunpack.c.l.b16 %v798
          %v928 = vunpack.c.l.b16 %v799
          %v929 = vunpack.c.l.b16 %v800
          %v930 = vunpack.c.l.b16 %v801
          %v931 = vunpack.c.l.b16 %v802
          %v932 = vunpack.c.l.b16 %v803
          %v933 = vunpack.c.l.b16 %v804
          %v934 = vunpack.c.l.b16 %v805
          %v935 = vunpack.c.l.b16 %v806
          %v936 = vunpack.c.l.b16 %v807
          %v937 = vunpack.c.l.b16 %v808
          %v938 = vunpack.c.l.b16 %v809
          %v939 = vunpack.c.l.b16 %v810
          %v940 = vunpack.c.l.b16 %v811
          %v941 = vunpack.c.l.b16 %v812
          %v942 = vunpack.c.l.b16 %v813
          %v943 = vunpack.c.l.b16 %v814
          %v944 = vunpack.c.l.b16 %v815
          %v945 = vunpack.c.l.b16 %v816
          %v946 = vunpack.c.l.b16 %v817
          %v947 = vunpack.c.l.b16 %v818
          %v948 = vunpack.c.l.b16 %v819
          %v949 = vunpack.c.l.b16 %v820
          %v950 = vunpack.c.l.b16 %v821
          %v951 = vunpack.c.l.b16 %v822
          %v952 = vunpack.c.l.b16 %v823
          %v953 = vunpack.c.l.b16 %v824
          %v954 = vunpack.c.l.b16 %v825
          %v955 = vunpack.c.l.b16 %v826
          %v956 = vunpack.c.l.b16 %v827
          %v957 = vpack.c.b16 %v894, %v893
          %v958 = vpack.c.b16 %v896, %v895
          %v959 = vpack.c.b16 %v898, %v897
          %v960 = vpack.c.b16 %v900, %v899
          %v961 = vpack.c.b16 %v902, %v901
          %v962 = vpack.c.b16 %v904, %v903
          %v963 = vpack.c.b16 %v906, %v905
          %v964 = vpack.c.b16 %v908, %v907
          %v965 = vpack.c.b16 %v910, %v909
          %v966 = vpack.c.b16 %v912, %v911
          %v967 = vpack.c.b16 %v914, %v913
          %v968 = vpack.c.b16 %v916, %v915
          %v969 = vpack.c.b16 %v918, %v917
          %v970 = vpack.c.b16 %v920, %v919
          %v971 = vpack.c.b16 %v922, %v921
          %v972 = vpack.c.b16 %v924, %v923
          %v973 = vpack.c.b16 %v926, %v925
          %v974 = vpack.c.b16 %v928, %v927
          %v975 = vpack.c.b16 %v930, %v929
          %v976 = vpack.c.b16 %v932, %v931
          %v977 = vpack.c.b16 %v934, %v933
          %v978 = vpack.c.b16 %v936, %v935
          %v979 = vpack.c.b16 %v938, %v937
          %v980 = vpack.c.b16 %v940, %v939
          %v981 = vpack.c.b16 %v942, %v941
          %v982 = vpack.c.b16 %v944, %v943
          %v983 = vpack.c.b16 %v946, %v945
          %v984 = vpack.c.b16 %v948, %v947
          %v985 = vpack.c.b16 %v950, %v949
          %v986 = vpack.c.b16 %v952, %v951
          %v987 = vpack.c.b16 %v954, %v953
          %v988 = vpack.c.b16 %v956, %v955
          %1021 = vmatprep.subr.bf16.mxu0 0
          %1022 = vmatpush1.bf16.msra.mxu0 %v964
          %1023 = vmatprep.subr.bf16.mxu0 0
          %1024 = vmatpush1.bf16.msra.mxu0 %v963
          %1025 = vmatprep.subr.bf16.mxu0 0
          %1026 = vmatpush1.bf16.msra.mxu0 %v962
          %1027 = vmatprep.subr.bf16.mxu0 0
          %1028 = vmatpush1.bf16.msra.mxu0 %v961
          %1029 = vmatprep.subr.bf16.mxu0 0
          %1030 = vmatpush1.bf16.msra.mxu0 %v960
          %1031 = vmatprep.subr.bf16.mxu0 0
          %1032 = vmatpush1.bf16.msra.mxu0 %v959
          %1033 = vmatprep.subr.bf16.mxu0 0
          %1034 = vmatpush1.bf16.msra.mxu0 %v958
          %1035 = vmatprep.subr.bf16.mxu0 0
          %1036 = vmatpush1.bf16.msra.mxu0 %v957
          %1037 = vmatprep.subr.bf16.mxu0 0
          %1038 = vmatpush2.bf16.msra.mxu0 %v972
          %1039 = vmatprep.subr.bf16.mxu0 0
          %1040 = vmatpush2.bf16.msra.mxu0 %v971
          %1041 = vmatprep.subr.bf16.mxu0 0
          %1042 = vmatpush2.bf16.msra.mxu0 %v970
          %1043 = vmatprep.subr.bf16.mxu0 0
          %1044 = vmatpush2.bf16.msra.mxu0 %v969
          %1045 = vmatprep.subr.bf16.mxu0 0
          %1046 = vmatpush2.bf16.msra.mxu0 %v968
          %1047 = vmatprep.subr.bf16.mxu0 0
          %1048 = vmatpush2.bf16.msra.mxu0 %v967
          %1049 = vmatprep.subr.bf16.mxu0 0
          %1050 = vmatpush2.bf16.msra.mxu0 %v966
          %1051 = vmatprep.subr.bf16.mxu0 0
          %1052 = vmatpush2.bf16.msra.mxu0 %v965
          %1053 = vmatprep.mubr.f32.mxu0 %v723
          %1054 = vmatmul.mubr.f32.gmra.mxu0 %v721
          %v1055 = vpop.f32.mrf.mxu0
          %v1056 = vadd.f32 %v828, %v1055
          %v1057 = vpop.f32.mrf.mxu0
          %1058 = vdwg.mxu0
          %1059 = vmatprep.subr.bf16.mxu0 0
          %1060 = vmatpush1.bf16.msra.mxu0 %v980
          %1061 = vmatprep.subr.bf16.mxu0 0
          %1062 = vmatpush1.bf16.msra.mxu0 %v979
          %1063 = vmatprep.subr.bf16.mxu0 0
          %1064 = vmatpush1.bf16.msra.mxu0 %v978
          %1065 = vmatprep.subr.bf16.mxu0 0
          %1066 = vmatpush1.bf16.msra.mxu0 %v977
          %1067 = vmatprep.subr.bf16.mxu0 0
          %1068 = vmatpush1.bf16.msra.mxu0 %v976
          %1069 = vmatprep.subr.bf16.mxu0 0
          %1070 = vmatpush1.bf16.msra.mxu0 %v975
          %1071 = vmatprep.subr.bf16.mxu0 0
          %1072 = vmatpush1.bf16.msra.mxu0 %v974
          %1073 = vmatprep.subr.bf16.mxu0 0
          %1074 = vmatpush1.bf16.msra.mxu0 %v973
          %1075 = vmatprep.subr.bf16.mxu0 0
          %1076 = vmatpush2.bf16.msra.mxu0 %v988
          %1077 = vmatprep.subr.bf16.mxu0 0
          %1078 = vmatpush2.bf16.msra.mxu0 %v987
          %1079 = vmatprep.subr.bf16.mxu0 0
          %1080 = vmatpush2.bf16.msra.mxu0 %v986
          %1081 = vmatprep.subr.bf16.mxu0 0
          %1082 = vmatpush2.bf16.msra.mxu0 %v985
          %1083 = vmatprep.subr.bf16.mxu0 0
          %1084 = vmatpush2.bf16.msra.mxu0 %v984
          %1085 = vmatprep.subr.bf16.mxu0 0
          %1086 = vmatpush2.bf16.msra.mxu0 %v983
          %1087 = vmatprep.subr.bf16.mxu0 0
          %1088 = vmatpush2.bf16.msra.mxu0 %v982
          %1089 = vmatprep.subr.bf16.mxu0 0
          %1090 = vmatpush2.bf16.msra.mxu0 %v981
          %1091 = vmatprep.mubr.f32.mxu0 %v762
          %1092 = vmatmul.mubr.f32.gmra.mxu0 %v760
          %v1093 = vpop.f32.mrf.mxu0
          %v1094 = vadd.f32 %v1056, %v1093
          %v1095 = vpop.f32.mrf.mxu0
          %1096 = vdwg.mxu0
          %v1097 = vmul.f32 %v1094, %v1094
          %vm1098 = vcmask 1040384
          %v1099 = vsel %vm1098, %v1097, 0.0
          %1100 = vadd.xlane.f32.xlu0 %v1099
          %v1101 = vpop.xlane.xlu0 %1100
          %v1102 = vmax.f32 %v1101, 1e-24
          %v1103 = vrsqrt.pop %v1102
          %v1104 = vmul.f32 %v1094, %v1103
          %1105 = vst [vmem:[%s293] sm:$0x1] %v1104
        $region56: #{inception_resnet_backbone_forward.1} parent=47 // pred_fallthru
          _
        %s1106 = sand.u32 %s195, 1
        %s1107 = scalar_lea.sflag [#allocation4], %s1106
        %s1108 = sand.u32 %s195, 1
        %s1109 = scalar_lea.vmem [#allocation3], %s1108
        // Predicated region
        $region57: #{inception_resnet_backbone_forward.1} parent=47 // pred_check
          %p1110 = pneg %p205
        $region58: #{inception_resnet_backbone_forward.1} parent=47 // pred_check_branch
          %1112 = sbr.rel (%p1110) target = $region60
        $region59: #{inception_resnet_backbone_forward.1} parent=47 // pred_region
          %s1114 = ssub.s32 16, 16
          %1115 = vsyncadd %s1107, %s1114
          %s1116 = smul.addr %s25, 16
          %s1117 = scalar_lea.hbm %s7, %s1116
          %s1119 = sshll.u32 %s1109, 4
          %s1120 = int_to_ptr.vmem [resolvable:$true] %s1119
          %1122 = dma.vmem_to_hbm [thread:$0]  %s1120, 16, %s1117, %s1107
        $region60: #{inception_resnet_backbone_forward.1} parent=47 // pred_fallthru
          _
      $region48: #{inception_resnet_backbone_forward.1} parent=5 // pred_fallthru
        _
      %p1123 = scmp.le.s32.totalorder 2, %s16
      // Predicated region
      $region61: #{inception_resnet_backbone_forward.1} parent=5 // pred_check
        %p1124 = pneg %p1123
      $region62: #{inception_resnet_backbone_forward.1} parent=5 // pred_check_branch
        %1126 = sbr.rel (%p1124) target = $region64
      $region63: #{inception_resnet_backbone_forward.1} parent=5 // pred_region
        %s1127 = ssub.s32 %s16, 2
        // Predicated region
        $region65: #{inception_resnet_backbone_forward.1} parent=63 // pred_check
          %p1128 = pneg %p211
        $region66: #{inception_resnet_backbone_forward.1} parent=63 // pred_check_branch
          %1130 = sbr.rel (%p1128) target = $region68
        $region67: #{inception_resnet_backbone_forward.1} parent=63 // pred_region
          %s1131 = sand.u32 %s196, 1
          %s1132 = scalar_lea.sflag [#allocation4], %s1131
          %s1133 = sand.u32 %s196, 1
          %s1134 = scalar_lea.vmem [#allocation3], %s1133
          %1135 = dma.done %s1132, 16
        $region68: #{inception_resnet_backbone_forward.1} parent=63 // pred_fallthru
          _
      $region64: #{inception_resnet_backbone_forward.1} parent=5 // pred_fallthru
        _
    $region6: #{inception_resnet_backbone_forward.1} parent=1 // loop_footer
      %s20 = sadd.s32 1, %s16
    $region7: #{inception_resnet_backbone_forward.1} parent=1 // loop_footer_branch
      %15 = sbr.rel target = $region3
    $region8: #{inception_resnet_backbone_forward.1} parent=1 // loop_exit
      _
    %1136 = vsyncpa [#allocation4], 1
    %s1137 = scalar_lea.sflag [#allocation4], 1
    %1138 = vsyncpa %s1137, 1

</llo_original>
